<compile_context>
chip_gen: v7x
topology: tpu7x:2x2x1
jax: 0.10.0
libtpu: 0.0.40
codegen_flags: <defaults>
</compile_context>

<pallas_src>
import functools
import math

import jax
import jax.numpy as jnp
from jax.experimental import pallas as pl
from jax.experimental.pallas import tpu as pltpu

N_NODES = 36
N_LAYERS = 5  # 1 input layer + (N_LAYERS - 1) hidden layers + 1 output layer
LANE = 128


def _silu(x):
    return x * jax.nn.sigmoid(x)


def _mlp_kernel(xT_ref, w_in_ref, b_in_ref, w_h_ref, b_h_ref, w_out_ref,
                b_out_ref, oT_ref, *, n_hidden_layers, apply_softplus,
                matmul_dtype):
    # Batch-on-lanes: x^T tile is [nIn, tb]; intermediates are [H, tb].
    xT = xT_ref[...]                                     # matmul dtype (bf16)

    # in_to_hidden + SiLU:  h = W_in @ x^T + b_in   (f32 accumulate)
    h = jnp.dot(w_in_ref[...], xT, preferred_element_type=jnp.float32)
    h = _silu(h + b_in_ref[...])                         # [H, tb] f32

    # hidden_to_hidden stack + SiLU (static Python loop: unrolled at trace time)
    for i in range(n_hidden_layers):
        h = jnp.dot(w_h_ref[i], h.astype(matmul_dtype),
                    preferred_element_type=jnp.float32)
        h = _silu(h + b_h_ref[i])

    # hidden_to_out (no activation unless softplus requested)
    out = jnp.dot(w_out_ref[...], h.astype(matmul_dtype),
                  preferred_element_type=jnp.float32)
    out = out + b_out_ref[...]
    if apply_softplus:
        out = jax.nn.softplus(out)

    oT_ref[...] = out.astype(oT_ref.dtype)               # lane-dense store


def mlp_forward(x, params, *, output='none', block_b=1024,
                matmul_dtype=jnp.bfloat16):
    """Run the `net` forward pass with a Pallas TPU kernel.

    x: [B, nIn] float32 (any B; zero-padded internally to a multiple of 128).
    params (torch [out, in] layout): w_in [H, nIn], b_in [H, 1],
            w_h [L-1, H, H], b_h [L-1, H, 1], w_out [nOut, H], b_out [nOut, 1].
    """
    B, nIn = x.shape
    H = params['w_in'].shape[0]
    nOut = params['w_out'].shape[0]
    n_hidden = params['w_h'].shape[0]

    # ---- batch tiling: always lane-aligned (multiple of 128) ---------------
    block_b = max(LANE, (block_b // LANE) * LANE)
    B_lane = max(LANE, math.ceil(B / LANE) * LANE)       # lane-aligned batch
    tb = min(block_b, B_lane)                            # tile size (mult of 128)
    B_pad = math.ceil(B_lane / tb) * tb

    # Batch-on-lanes: feed x^T so the batch dim sits on the lane axis.
    xT = x.T                                             # [nIn, B]
    if B_pad > B:
        xT = jnp.pad(xT, ((0, 0), (0, B_pad - B)))
    xT = xT.astype(matmul_dtype)

    # bf16 MXU operands; biases / accumulation stay f32.
    w_in = params['w_in'].astype(matmul_dtype)
    w_h = params['w_h'].astype(matmul_dtype)
    w_out = params['w_out'].astype(matmul_dtype)
    b_in = params['b_in'].astype(jnp.float32)
    b_h = params['b_h'].astype(jnp.float32)
    b_out = params['b_out'].astype(jnp.float32)

    kernel = functools.partial(
        _mlp_kernel,
        n_hidden_layers=n_hidden,
        apply_softplus=(output == 'softplus'),
        matmul_dtype=matmul_dtype,
    )

    grid = (B_pad // tb,)
    # Weights/biases get full-array blocks with constant index maps, so their
    # VMEM copies are reused across grid steps.
    in_specs = [
        pl.BlockSpec((nIn, tb), lambda i: (0, i)),            # x^T tile
        pl.BlockSpec((H, nIn), lambda i: (0, 0)),             # w_in  [out, in]
        pl.BlockSpec((H, 1), lambda i: (0, 0)),               # b_in  [out, 1]
        pl.BlockSpec((n_hidden, H, H), lambda i: (0, 0, 0)),  # w_h stack
        pl.BlockSpec((n_hidden, H, 1), lambda i: (0, 0, 0)),  # b_h stack
        pl.BlockSpec((nOut, H), lambda i: (0, 0)),            # w_out
        pl.BlockSpec((nOut, 1), lambda i: (0, 0)),            # b_out
    ]
    out_spec = pl.BlockSpec((nOut, tb), lambda i: (0, i))

    oT = pl.pallas_call(
        kernel,
        out_shape=jax.ShapeDtypeStruct((nOut, B_pad), jnp.float32),
        grid_spec=pltpu.PrefetchScalarGridSpec(
            num_scalar_prefetch=0,
            grid=grid,
            in_specs=in_specs,
            out_specs=out_spec,
        ),
        compiler_params=pltpu.CompilerParams(
            dimension_semantics=("parallel",)),
    )(xT, w_in, b_in, w_h, b_h, w_out, b_out)

    return oT.T[:B]                              # back to [B, nOut]


def init_params(key, nIn, nOut, n_nodes=N_NODES, n_layers=N_LAYERS):
    """Parameter init mimicking torch.nn.Linear's U(-1/sqrt(fan_in), +), [out, in] layout."""
    ks = jax.random.split(key, 6)

    def unif(k, shape, fan_in):
        bound = 1.0 / jnp.sqrt(jnp.float32(fan_in))
        return jax.random.uniform(k, shape, jnp.float32, -bound, bound)

    n_hidden = n_layers - 1
    return {
        'w_in': unif(ks[0], (n_nodes, nIn), nIn),              # [out, in]
        'b_in': unif(ks[1], (n_nodes, 1), nIn),                # [out, 1]
        'w_h': unif(ks[2], (n_hidden, n_nodes, n_nodes), n_nodes),
        'b_h': unif(ks[3], (n_hidden, n_nodes, 1), n_nodes),
        'w_out': unif(ks[4], (nOut, n_nodes), n_nodes),
        'b_out': unif(ks[5], (nOut, 1), n_nodes),
    }


def reference_forward(x, params, output='none', matmul_dtype=jnp.float32):
    """Pure-JAX reference (same math; optional matched bf16 matmul operands)."""

    def lin(h, w, b):  # w [out, in], b [out, 1]
        return jnp.dot(h.astype(matmul_dtype), w.astype(matmul_dtype).T,
                       preferred_element_type=jnp.float32) + b[:, 0]

    h = _silu(lin(x, params['w_in'], params['b_in']))
    for i in range(params['w_h'].shape[0]):
        h = _silu(lin(h, params['w_h'][i], params['b_h'][i]))
    h = lin(h, params['w_out'], params['b_out'])
    if output == 'softplus':
        h = jax.nn.softplus(h)
    return h


if __name__ == "__main__":
    key = jax.random.PRNGKey(0)
    k_x, k_p = jax.random.split(key)

    # Small shapes consistent with the module: an SDE drift/diffusion net
    # mapping (t, state) -> output.
    B, nIn, nOut = 16, 4, 3
    x = jax.random.normal(k_x, (B, nIn), dtype=jnp.float32)
    params = init_params(k_p, nIn, nOut)

    out = mlp_forward(x, params, output='none')       # single grid step
    out = jax.block_until_ready(out)

    # Check against a pure-JAX reference using the same bf16-operand /
    # f32-accumulation math as the kernel.
    ref = reference_forward(x, params, output='none', matmul_dtype=jnp.bfloat16)
    assert out.shape == (B, nOut)
    assert jnp.allclose(out, ref, atol=1e-3, rtol=1e-3), "mismatch vs reference"

    # Also exercise the softplus output head (as in the module's option).
    out_sp = jax.block_until_ready(mlp_forward(x, params, output='softplus'))
    ref_sp = reference_forward(x, params, output='softplus',
                               matmul_dtype=jnp.bfloat16)
    assert jnp.allclose(out_sp, ref_sp, atol=1e-3, rtol=1e-3), "softplus mismatch"

    print("KERNEL_OK")
</pallas_src>

<mosaic_0001>
module attributes {stable_mosaic.version = 11 : i64} {
  func.func @_mlp_kernel(%arg0: i32, %arg1: memref<4x128xbf16, #tpu.memory_space<vmem>>, %arg2: memref<36x4xbf16, #tpu.memory_space<vmem>>, %arg3: memref<36x1xf32, #tpu.memory_space<vmem>>, %arg4: memref<4x36x36xbf16, #tpu.memory_space<vmem>>, %arg5: memref<4x36x1xf32, #tpu.memory_space<vmem>>, %arg6: memref<3x36xbf16, #tpu.memory_space<vmem>>, %arg7: memref<3x1xf32, #tpu.memory_space<vmem>>, %arg8: memref<3x128xf32, #tpu.memory_space<vmem>>) attributes {dimension_semantics = [#tpu.dimension_semantics<parallel>], iteration_bounds = array<i64: 1>, scalar_prefetch = 0 : i64, scratch_operands = 0 : i64, tpu.core_type = #tpu.core_type<tc>, window_params = [{transform_indices = @transform_0, window_bounds = array<i64: 4, 128>}, {pipeline_mode = #tpu.pipeline_mode<synchronous>, transform_indices = @transform_1, window_bounds = array<i64: 36, 4>}, {pipeline_mode = #tpu.pipeline_mode<synchronous>, transform_indices = @transform_2, window_bounds = array<i64: 36, 1>}, {pipeline_mode = #tpu.pipeline_mode<synchronous>, transform_indices = @transform_3, window_bounds = array<i64: 4, 36, 36>}, {pipeline_mode = #tpu.pipeline_mode<synchronous>, transform_indices = @transform_4, window_bounds = array<i64: 4, 36, 1>}, {pipeline_mode = #tpu.pipeline_mode<synchronous>, transform_indices = @transform_5, window_bounds = array<i64: 3, 36>}, {pipeline_mode = #tpu.pipeline_mode<synchronous>, transform_indices = @transform_6, window_bounds = array<i64: 3, 1>}, {transform_indices = @transform_7, window_bounds = array<i64: 3, 128>}]} {
    %c0 = arith.constant 0 : index
    %c0_0 = arith.constant 0 : index
    %0 = vector.load %arg1[%c0, %c0_0] : memref<4x128xbf16, #tpu.memory_space<vmem>>, vector<4x128xbf16>
    %c0_1 = arith.constant 0 : index
    %c0_2 = arith.constant 0 : index
    %1 = vector.load %arg2[%c0_1, %c0_2] : memref<36x4xbf16, #tpu.memory_space<vmem>>, vector<36x4xbf16>
    %cst = arith.constant dense<0.000000e+00> : vector<36x128xf32>
    %2 = tpu.matmul %1, %0, %cst {dimension_numbers = #tpu.dot_dimension_numbers<[1], [0], [0], [1], [0, 0, 1, 1], [], []>} : vector<36x4xbf16>, vector<4x128xbf16>, vector<36x128xf32> -> vector<36x128xf32>
    %c0_3 = arith.constant 0 : index
    %c0_4 = arith.constant 0 : index
    %3 = vector.load %arg3[%c0_3, %c0_4] : memref<36x1xf32, #tpu.memory_space<vmem>>, vector<36x1xf32>
    %4 = vector.broadcast %3 : vector<36x1xf32> to vector<36x128xf32>
    %5 = arith.addf %2, %4 : vector<36x128xf32>
    %6 = arith.negf %5 : vector<36x128xf32>
    %7 = math.exp %6 : vector<36x128xf32>
    %cst_5 = arith.constant 1.000000e+00 : f32
    %8 = vector.broadcast %cst_5 : f32 to vector<36x128xf32>
    %9 = arith.addf %8, %7 : vector<36x128xf32>
    %10 = arith.divf %8, %9 : vector<36x128xf32>
    %11 = arith.mulf %5, %10 : vector<36x128xf32>
    %c0_6 = arith.constant 0 : index
    %c0_7 = arith.constant 0 : index
    %c0_8 = arith.constant 0 : index
    %12 = vector.load %arg4[%c0_6, %c0_7, %c0_8] : memref<4x36x36xbf16, #tpu.memory_space<vmem>>, vector<1x36x36xbf16>
    %13 = vector.shape_cast %12 : vector<1x36x36xbf16> to vector<36x36xbf16>
    %14 = arith.truncf %11 : vector<36x128xf32> to vector<36x128xbf16>
    %cst_9 = arith.constant dense<0.000000e+00> : vector<36x128xf32>
    %15 = tpu.matmul %13, %14, %cst_9 {dimension_numbers = #tpu.dot_dimension_numbers<[1], [0], [0], [1], [0, 0, 1, 1], [], []>} : vector<36x36xbf16>, vector<36x128xbf16>, vector<36x128xf32> -> vector<36x128xf32>
    %c0_10 = arith.constant 0 : index
    %c0_11 = arith.constant 0 : index
    %c0_12 = arith.constant 0 : index
    %16 = vector.load %arg5[%c0_10, %c0_11, %c0_12] : memref<4x36x1xf32, #tpu.memory_space<vmem>>, vector<1x36x1xf32>
    %17 = vector.shape_cast %16 : vector<1x36x1xf32> to vector<36x1xf32>
    %18 = vector.broadcast %17 : vector<36x1xf32> to vector<36x128xf32>
    %19 = arith.addf %15, %18 : vector<36x128xf32>
    %20 = arith.negf %19 : vector<36x128xf32>
    %21 = math.exp %20 : vector<36x128xf32>
    %cst_13 = arith.constant 1.000000e+00 : f32
    %22 = vector.broadcast %cst_13 : f32 to vector<36x128xf32>
    %23 = arith.addf %22, %21 : vector<36x128xf32>
    %24 = arith.divf %22, %23 : vector<36x128xf32>
    %25 = arith.mulf %19, %24 : vector<36x128xf32>
    %c1 = arith.constant 1 : index
    %c0_14 = arith.constant 0 : index
    %c0_15 = arith.constant 0 : index
    %26 = vector.load %arg4[%c1, %c0_14, %c0_15] : memref<4x36x36xbf16, #tpu.memory_space<vmem>>, vector<1x36x36xbf16>
    %27 = vector.shape_cast %26 : vector<1x36x36xbf16> to vector<36x36xbf16>
    %28 = arith.truncf %25 : vector<36x128xf32> to vector<36x128xbf16>
    %cst_16 = arith.constant dense<0.000000e+00> : vector<36x128xf32>
    %29 = tpu.matmul %27, %28, %cst_16 {dimension_numbers = #tpu.dot_dimension_numbers<[1], [0], [0], [1], [0, 0, 1, 1], [], []>} : vector<36x36xbf16>, vector<36x128xbf16>, vector<36x128xf32> -> vector<36x128xf32>
    %c1_17 = arith.constant 1 : index
    %c0_18 = arith.constant 0 : index
    %c0_19 = arith.constant 0 : index
    %30 = vector.load %arg5[%c1_17, %c0_18, %c0_19] : memref<4x36x1xf32, #tpu.memory_space<vmem>>, vector<1x36x1xf32>
    %31 = vector.shape_cast %30 : vector<1x36x1xf32> to vector<36x1xf32>
    %32 = vector.broadcast %31 : vector<36x1xf32> to vector<36x128xf32>
    %33 = arith.addf %29, %32 : vector<36x128xf32>
    %34 = arith.negf %33 : vector<36x128xf32>
    %35 = math.exp %34 : vector<36x128xf32>
    %cst_20 = arith.constant 1.000000e+00 : f32
    %36 = vector.broadcast %cst_20 : f32 to vector<36x128xf32>
    %37 = arith.addf %36, %35 : vector<36x128xf32>
    %38 = arith.divf %36, %37 : vector<36x128xf32>
    %39 = arith.mulf %33, %38 : vector<36x128xf32>
    %c2 = arith.constant 2 : index
    %c0_21 = arith.constant 0 : index
    %c0_22 = arith.constant 0 : index
    %40 = vector.load %arg4[%c2, %c0_21, %c0_22] : memref<4x36x36xbf16, #tpu.memory_space<vmem>>, vector<1x36x36xbf16>
    %41 = vector.shape_cast %40 : vector<1x36x36xbf16> to vector<36x36xbf16>
    %42 = arith.truncf %39 : vector<36x128xf32> to vector<36x128xbf16>
    %cst_23 = arith.constant dense<0.000000e+00> : vector<36x128xf32>
    %43 = tpu.matmul %41, %42, %cst_23 {dimension_numbers = #tpu.dot_dimension_numbers<[1], [0], [0], [1], [0, 0, 1, 1], [], []>} : vector<36x36xbf16>, vector<36x128xbf16>, vector<36x128xf32> -> vector<36x128xf32>
    %c2_24 = arith.constant 2 : index
    %c0_25 = arith.constant 0 : index
    %c0_26 = arith.constant 0 : index
    %44 = vector.load %arg5[%c2_24, %c0_25, %c0_26] : memref<4x36x1xf32, #tpu.memory_space<vmem>>, vector<1x36x1xf32>
    %45 = vector.shape_cast %44 : vector<1x36x1xf32> to vector<36x1xf32>
    %46 = vector.broadcast %45 : vector<36x1xf32> to vector<36x128xf32>
    %47 = arith.addf %43, %46 : vector<36x128xf32>
    %48 = arith.negf %47 : vector<36x128xf32>
    %49 = math.exp %48 : vector<36x128xf32>
    %cst_27 = arith.constant 1.000000e+00 : f32
    %50 = vector.broadcast %cst_27 : f32 to vector<36x128xf32>
    %51 = arith.addf %50, %49 : vector<36x128xf32>
    %52 = arith.divf %50, %51 : vector<36x128xf32>
    %53 = arith.mulf %47, %52 : vector<36x128xf32>
    %c3 = arith.constant 3 : index
    %c0_28 = arith.constant 0 : index
    %c0_29 = arith.constant 0 : index
    %54 = vector.load %arg4[%c3, %c0_28, %c0_29] : memref<4x36x36xbf16, #tpu.memory_space<vmem>>, vector<1x36x36xbf16>
    %55 = vector.shape_cast %54 : vector<1x36x36xbf16> to vector<36x36xbf16>
    %56 = arith.truncf %53 : vector<36x128xf32> to vector<36x128xbf16>
    %cst_30 = arith.constant dense<0.000000e+00> : vector<36x128xf32>
    %57 = tpu.matmul %55, %56, %cst_30 {dimension_numbers = #tpu.dot_dimension_numbers<[1], [0], [0], [1], [0, 0, 1, 1], [], []>} : vector<36x36xbf16>, vector<36x128xbf16>, vector<36x128xf32> -> vector<36x128xf32>
    %c3_31 = arith.constant 3 : index
    %c0_32 = arith.constant 0 : index
    %c0_33 = arith.constant 0 : index
    %58 = vector.load %arg5[%c3_31, %c0_32, %c0_33] : memref<4x36x1xf32, #tpu.memory_space<vmem>>, vector<1x36x1xf32>
    %59 = vector.shape_cast %58 : vector<1x36x1xf32> to vector<36x1xf32>
    %60 = vector.broadcast %59 : vector<36x1xf32> to vector<36x128xf32>
    %61 = arith.addf %57, %60 : vector<36x128xf32>
    %62 = arith.negf %61 : vector<36x128xf32>
    %63 = math.exp %62 : vector<36x128xf32>
    %cst_34 = arith.constant 1.000000e+00 : f32
    %64 = vector.broadcast %cst_34 : f32 to vector<36x128xf32>
    %65 = arith.addf %64, %63 : vector<36x128xf32>
    %66 = arith.divf %64, %65 : vector<36x128xf32>
    %67 = arith.mulf %61, %66 : vector<36x128xf32>
    %c0_35 = arith.constant 0 : index
    %c0_36 = arith.constant 0 : index
    %68 = vector.load %arg6[%c0_35, %c0_36] : memref<3x36xbf16, #tpu.memory_space<vmem>>, vector<3x36xbf16>
    %69 = arith.truncf %67 : vector<36x128xf32> to vector<36x128xbf16>
    %cst_37 = arith.constant dense<0.000000e+00> : vector<3x128xf32>
    %70 = tpu.matmul %68, %69, %cst_37 {dimension_numbers = #tpu.dot_dimension_numbers<[1], [0], [0], [1], [0, 0, 1, 1], [], []>} : vector<3x36xbf16>, vector<36x128xbf16>, vector<3x128xf32> -> vector<3x128xf32>
    %c0_38 = arith.constant 0 : index
    %c0_39 = arith.constant 0 : index
    %71 = vector.load %arg7[%c0_38, %c0_39] : memref<3x1xf32, #tpu.memory_space<vmem>>, vector<3x1xf32>
    %72 = vector.broadcast %71 : vector<3x1xf32> to vector<3x128xf32>
    %73 = arith.addf %70, %72 : vector<3x128xf32>
    %c0_40 = arith.constant 0 : index
    %c0_41 = arith.constant 0 : index
    %74 = vector.load %arg8[%c0_40, %c0_41] : memref<3x128xf32, #tpu.memory_space<vmem>>, vector<3x128xf32>
    tpu.vector_store %arg8[%c0_40, %c0_41], %73 {strides = array<i32>} : memref<3x128xf32, #tpu.memory_space<vmem>>, vector<3x128xf32>,
    return
  }
  func.func @transform_0(%arg0: i32) -> (i32, i32) {
    %c0_i32 = arith.constant 0 : i32
    %c0_i32_0 = arith.constant 0 : i32
    return %c0_i32, %arg0 : i32, i32
  }
  func.func @transform_1(%arg0: i32) -> (i32, i32) {
    %c0_i32 = arith.constant 0 : i32
    %c0_i32_0 = arith.constant 0 : i32
    %c0_i32_1 = arith.constant 0 : i32
    return %c0_i32, %c0_i32_0 : i32, i32
  }
  func.func @transform_2(%arg0: i32) -> (i32, i32) {
    %c0_i32 = arith.constant 0 : i32
    %c0_i32_0 = arith.constant 0 : i32
    %c0_i32_1 = arith.constant 0 : i32
    return %c0_i32, %c0_i32_0 : i32, i32
  }
  func.func @transform_3(%arg0: i32) -> (i32, i32, i32) {
    %c0_i32 = arith.constant 0 : i32
    %c0_i32_0 = arith.constant 0 : i32
    %c0_i32_1 = arith.constant 0 : i32
    %c0_i32_2 = arith.constant 0 : i32
    return %c0_i32, %c0_i32_0, %c0_i32_1 : i32, i32, i32
  }
  func.func @transform_4(%arg0: i32) -> (i32, i32, i32) {
    %c0_i32 = arith.constant 0 : i32
    %c0_i32_0 = arith.constant 0 : i32
    %c0_i32_1 = arith.constant 0 : i32
    %c0_i32_2 = arith.constant 0 : i32
    return %c0_i32, %c0_i32_0, %c0_i32_1 : i32, i32, i32
  }
  func.func @transform_5(%arg0: i32) -> (i32, i32) {
    %c0_i32 = arith.constant 0 : i32
    %c0_i32_0 = arith.constant 0 : i32
    %c0_i32_1 = arith.constant 0 : i32
    return %c0_i32, %c0_i32_0 : i32, i32
  }
  func.func @transform_6(%arg0: i32) -> (i32, i32) {
    %c0_i32 = arith.constant 0 : i32
    %c0_i32_0 = arith.constant 0 : i32
    %c0_i32_1 = arith.constant 0 : i32
    return %c0_i32, %c0_i32_0 : i32, i32
  }
  func.func @transform_7(%arg0: i32) -> (i32, i32) {
    %c0_i32 = arith.constant 0 : i32
    %c0_i32_0 = arith.constant 0 : i32
    return %c0_i32, %arg0 : i32, i32
  }
}

</mosaic_0001>

<llo_original>
// kernel: tpu_custom_call.1
$region0: #{tpu_custom_call.1}
  #allocation0 [shape = 'u32[]', space=smem, size = 0x4, offset = 0x4, fixed_abs, tag = 'smem constant byte address 0x4 - core index']
  #allocation1 [shape = 'u32[144,128]{1,0:T(1,128)}', space=vmem, size = 0x12000, scoped, tag = 'internal scratch']
  %s0 = inlined_call_operand.vmem [shape: bf16[4,128], index: 0, kind: input, shape index: {}]
  %s1 = inlined_call_operand.vmem [shape: bf16[36,4], index: 1, kind: input, shape index: {}]
  %s2 = inlined_call_operand.vmem [shape: f32[36,1], index: 2, kind: input, shape index: {}]
  %s3 = inlined_call_operand.vmem [shape: bf16[4,36,36], index: 3, kind: input, shape index: {}]
  %s4 = inlined_call_operand.vmem [shape: f32[4,36,1], index: 4, kind: input, shape index: {}]
  %s5 = inlined_call_operand.vmem [shape: bf16[3,36], index: 5, kind: input, shape index: {}]
  %s6 = inlined_call_operand.vmem [shape: f32[3,1], index: 6, kind: input, shape index: {}]
  %s7 = inlined_call_operand.hbm [shape: f32[3,128], index: 7, kind: output, shape index: {}]
  %s8 = sld [smem:[#allocation0]]
  $region38: #{tpu_custom_call.1} parent=0
    _
  %s10 = ssub.s32 1, %s8
  %s11 = scalar_select 0, %s10, %s8
  $region1: #{tpu_custom_call.1} parent=0
    #allocation2 [shape = 'u8[2048]{0}', space=vmem, size = 0x800, scoped, tag = 'output window, operand 0, single buffered']
    #allocation3 [shape = 's32[1]{0}', space=sflag, size = 0x4, scoped, tag = 'scoped memory for tpu_custom_call.1']
    %12 = vsyncpa [#allocation3], 0
    // Predicated region
    $region2: #{tpu_custom_call.1} parent=1 // pred_check
      _
    $region3: #{tpu_custom_call.1} parent=1 // pred_check_branch
      %14 = sbr.rel (0) target = $region5
    $region4: #{tpu_custom_call.1} parent=1 // pred_region
      _
    $region5: #{tpu_custom_call.1} parent=1 // pred_fallthru
      _
    // Predicated region
    $region6: #{tpu_custom_call.1} parent=1 // pred_check
      _
    $region7: #{tpu_custom_call.1} parent=1 // pred_check_branch
      %16 = sbr.rel (0) target = $region9
    $region8: #{tpu_custom_call.1} parent=1 // pred_region
      _
    $region9: #{tpu_custom_call.1} parent=1 // pred_fallthru
      _
    // Predicated region
    $region10: #{tpu_custom_call.1} parent=1 // pred_check
      _
    $region11: #{tpu_custom_call.1} parent=1 // pred_check_branch
      %18 = sbr.rel (0) target = $region13
    $region12: #{tpu_custom_call.1} parent=1 // pred_region
      _
    $region13: #{tpu_custom_call.1} parent=1 // pred_fallthru
      _
    // Predicated region
    $region14: #{tpu_custom_call.1} parent=1 // pred_check
      _
    $region15: #{tpu_custom_call.1} parent=1 // pred_check_branch
      %20 = sbr.rel (0) target = $region17
    $region16: #{tpu_custom_call.1} parent=1 // pred_region
      _
    $region17: #{tpu_custom_call.1} parent=1 // pred_fallthru
      _
    // Predicated region
    $region18: #{tpu_custom_call.1} parent=1 // pred_check
      _
    $region19: #{tpu_custom_call.1} parent=1 // pred_check_branch
      %22 = sbr.rel (0) target = $region21
    $region20: #{tpu_custom_call.1} parent=1 // pred_region
      _
    $region21: #{tpu_custom_call.1} parent=1 // pred_fallthru
      _
    // Predicated region
    $region22: #{tpu_custom_call.1} parent=1 // pred_check
      _
    $region23: #{tpu_custom_call.1} parent=1 // pred_check_branch
      %24 = sbr.rel (0) target = $region25
    $region24: #{tpu_custom_call.1} parent=1 // pred_region
      _
    $region25: #{tpu_custom_call.1} parent=1 // pred_fallthru
      _
    // Predicated region
    $region26: #{tpu_custom_call.1} parent=1 // pred_check
      _
    $region27: #{tpu_custom_call.1} parent=1 // pred_check_branch
      %26 = sbr.rel (0) target = $region29
    $region28: #{tpu_custom_call.1} parent=1 // pred_region
      _
    $region29: #{tpu_custom_call.1} parent=1 // pred_fallthru
      _
    %v28 = vld [vmem:[%s0] sm:$0x3]
    %v29 = vld [vmem:[%s1] sm:$0xf]
    %v30 = vld [vmem:[%s1 + $0x4] sm:$0xf]
    %v31 = vld [vmem:[%s1 + $0x8] sm:$0xf]
    %v32 = vld [vmem:[%s1 + $0xc] sm:$0xf]
    %v33 = vld [vmem:[%s1 + $0x10] sm:$0x3]
    %v34 = vld [vmem:[%s2] sm:$0xff]
    %v35 = vld [vmem:[%s2 + $0x8] sm:$0xff]
    %v36 = vld [vmem:[%s2 + $0x10] sm:$0xff]
    %v37 = vld [vmem:[%s2 + $0x18] sm:$0xff]
    %v38 = vld [vmem:[%s2 + $0x20] sm:$0xf]
    %40 = vset.pattern.permute.xlu0 0
    %41 = vperm.xlu0 %40, %v34
    %v42 = vpop.permute.xlu0 %41
    %45 = vset.pattern.permute.xlu0 0
    %46 = vperm.xlu0 %45, %v35
    %v47 = vpop.permute.xlu0 %46
    %50 = vset.pattern.permute.xlu0 0
    %51 = vperm.xlu0 %50, %v36
    %v52 = vpop.permute.xlu0 %51
    %55 = vset.pattern.permute.xlu0 0
    %56 = vperm.xlu0 %55, %v37
    %v57 = vpop.permute.xlu0 %56
    %60 = vset.pattern.permute.xlu0 0
    %61 = vperm.xlu0 %60, %v38
    %v62 = vpop.permute.xlu0 %61
    %v69 = vunpack.c.l.b16 %v29
    %v70 = vunpack.c.l.b16 %v30
    %v71 = vunpack.c.l.b16 %v31
    %v72 = vunpack.c.l.b16 %v32
    %v73 = vunpack.c.l.b16 %v33
    %v74 = vpack.c.b16 %v70, %v69
    %v75 = vpack.c.b16 %v72, %v71
    %v76 = vpack.c.b16 %v73, %v73
    %vm77 = vcmask 31744
    %v79 = vsel %vm77, %v74, 0
    %v82 = vsel %vm77, %v75, 0
    %v85 = vsel %vm77, %v76, 0
    %vm87 = vcmask 1041408
    %v89 = vsel %vm87, %v28, 0
    %91 = vmatprep.subr.bf16.mxu0 0
    %92 = vmatpush1.bf16.msra.mxu0 %v89
    %93 = vmatprep.subr.bf16.mxu0 0
    %94 = vmatpush1.bf16.msra.mxu0 0
    %95 = vmatprep.subr.bf16.mxu0 0
    %96 = vmatpush1.bf16.msra.mxu0 0
    %97 = vmatprep.subr.bf16.mxu0 0
    %98 = vmatpush1.bf16.msra.mxu0 0
    %99 = vmatprep.subr.bf16.mxu0 0
    %100 = vmatpush1.bf16.msra.mxu0 0
    %101 = vmatprep.subr.bf16.mxu0 0
    %102 = vmatpush1.bf16.msra.mxu0 0
    %103 = vmatprep.subr.bf16.mxu0 0
    %104 = vmatpush1.bf16.msra.mxu0 0
    %105 = vmatprep.subr.bf16.mxu0 0
    %106 = vmatpush1.bf16.msra.mxu0 0
    %107 = vmatprep.subr.bf16.mxu0 0
    %108 = vmatpush1.bf16.msra.mxu0 0
    %109 = vmatprep.subr.bf16.mxu0 0
    %110 = vmatpush1.bf16.msra.mxu0 0
    %111 = vmatprep.subr.bf16.mxu0 0
    %112 = vmatpush1.bf16.msra.mxu0 0
    %113 = vmatprep.subr.bf16.mxu0 0
    %114 = vmatpush1.bf16.msra.mxu0 0
    %115 = vmatprep.subr.bf16.mxu0 0
    %116 = vmatpush1.bf16.msra.mxu0 0
    %117 = vmatprep.subr.bf16.mxu0 0
    %118 = vmatpush1.bf16.msra.mxu0 0
    %119 = vmatprep.subr.bf16.mxu0 0
    %120 = vmatpush1.bf16.msra.mxu0 0
    %121 = vmatprep.subr.bf16.mxu0 0
    %122 = vmatpush1.bf16.msra.mxu0 0
    %123 = vmatprep.mubr.bf16.mxu0 0
    %124 = vmatmul.mubr.bf16.gmra.mrb[0].mxu0 %v79
    %v125 = vpop.f32.mrb[0].mxu0
    %v126 = vadd.f32 %v42, %v125
    %v127 = vpop.f32.mrb[0].mxu0
    %v128 = vpop.f32.mrb[0].mxu0
    %v129 = vadd.f32 %v47, %v128
    %v130 = vpop.f32.mrb[0].mxu0
    %131 = vmatprep.mubr.bf16.mxu0 0
    %132 = vmatmul.mubr.bf16.gmra.mrb[0].mxu0 %v82
    %v133 = vpop.f32.mrb[0].mxu0
    %v134 = vadd.f32 %v52, %v133
    %v135 = vpop.f32.mrb[0].mxu0
    %v136 = vpop.f32.mrb[0].mxu0
    %v137 = vadd.f32 %v57, %v136
    %v138 = vpop.f32.mrb[0].mxu0
    %139 = vmatprep.mubr.bf16.mxu0 0
    %140 = vmatmul.mubr.bf16.gmra.mrb[0].mxu0 %v85
    %v141 = vpop.f32.mrb[0].mxu0
    %v142 = vadd.f32 %v62, %v141
    %v143 = vpop.f32.mrb[0].mxu0
    %v144 = vpop.f32.mrb[0].mxu0
    %v145 = vpop.f32.mrb[0].mxu0
    %146 = vdwg.mxu0
    %v147 = vxor.u32 %v126, 2147483648
    %v148 = vxor.u32 %v129, 2147483648
    %v149 = vxor.u32 %v134, 2147483648
    %v150 = vxor.u32 %v137, 2147483648
    %v151 = vxor.u32 %v142, 2147483648
    %v152 = vmul.f32 %v147, 1.442695
    %v153 = vpow.pop %v152
    %v154 = vmul.f32 %v148, 1.442695
    %v155 = vpow.pop %v154
    %v156 = vmul.f32 %v149, 1.442695
    %v157 = vpow.pop %v156
    %v158 = vmul.f32 %v150, 1.442695
    %v159 = vpow.pop %v158
    %v160 = vmul.f32 %v151, 1.442695
    %v161 = vpow.pop %v160
    %v162 = vadd.f32 %v153, 1.0
    %v163 = vadd.f32 %v155, 1.0
    %v164 = vadd.f32 %v157, 1.0
    %v165 = vadd.f32 %v159, 1.0
    %v166 = vadd.f32 %v161, 1.0
    %v167 = vrcp.pop %v162
    %v168 = vmul.f32 1.0, %v167
    %v169 = vrcp.pop %v163
    %v170 = vmul.f32 1.0, %v169
    %v171 = vrcp.pop %v164
    %v172 = vmul.f32 1.0, %v171
    %v173 = vrcp.pop %v165
    %v174 = vmul.f32 1.0, %v173
    %v175 = vrcp.pop %v166
    %v176 = vmul.f32 1.0, %v175
    %v177 = vmul.f32 %v126, %v168
    %v178 = vmul.f32 %v129, %v170
    %v179 = vmul.f32 %v134, %v172
    %v180 = vmul.f32 %v137, %v174
    %v181 = vmul.f32 %v142, %v176
    %v182 = vld [vmem:[%s3] sm:$0xf]
    %v183 = vld [vmem:[%s3 + $0x4] sm:$0xf]
    %v184 = vld [vmem:[%s3 + $0x8] sm:$0xf]
    %v185 = vld [vmem:[%s3 + $0xc] sm:$0xf]
    %v186 = vld [vmem:[%s3 + $0x10] sm:$0x3]
    %v187 = vpack.c.bf16 %v178, %v177
    %v188 = vpack.c.bf16 %v180, %v179
    %v189 = vpack.c.bf16 %v181, %v181
    %v190 = vld [vmem:[%s4] sm:$0xff]
    %v191 = vld [vmem:[%s4 + $0x8] sm:$0xff]
    %v192 = vld [vmem:[%s4 + $0x10] sm:$0xff]
    %v193 = vld [vmem:[%s4 + $0x18] sm:$0xff]
    %v194 = vld [vmem:[%s4 + $0x20] sm:$0xf]
    %196 = vset.pattern.permute.xlu0 0
    %197 = vperm.xlu0 %196, %v190
    %v198 = vpop.permute.xlu0 %197
    %201 = vset.pattern.permute.xlu0 0
    %202 = vperm.xlu0 %201, %v191
    %v203 = vpop.permute.xlu0 %202
    %206 = vset.pattern.permute.xlu0 0
    %207 = vperm.xlu0 %206, %v192
    %v208 = vpop.permute.xlu0 %207
    %211 = vset.pattern.permute.xlu0 0
    %212 = vperm.xlu0 %211, %v193
    %v213 = vpop.permute.xlu0 %212
    %216 = vset.pattern.permute.xlu0 0
    %217 = vperm.xlu0 %216, %v194
    %v218 = vpop.permute.xlu0 %217
    %v225 = vunpack.c.l.b16 %v182
    %v226 = vunpack.c.l.b16 %v183
    %v227 = vunpack.c.l.b16 %v184
    %v228 = vunpack.c.l.b16 %v185
    %v229 = vunpack.c.l.b16 %v186
    %v230 = vpack.c.b16 %v226, %v225
    %v231 = vpack.c.b16 %v228, %v227
    %v232 = vpack.c.b16 %v229, %v229
    %vm233 = vcmask 293888
    %v235 = vsel %vm233, %v230, 0
    %v238 = vsel %vm233, %v231, 0
    %v241 = vsel %vm233, %v232, 0
    %v244 = vsel %vm87, %v189, 0
    %246 = vmatprep.subr.bf16.mxu0 0
    %247 = vmatpush1.bf16.msra.mxu0 %v187
    %248 = vmatprep.subr.bf16.mxu0 0
    %249 = vmatpush1.bf16.msra.mxu0 %v188
    %250 = vmatprep.subr.bf16.mxu0 0
    %251 = vmatpush1.bf16.msra.mxu0 %v244
    %252 = vmatprep.subr.bf16.mxu0 0
    %253 = vmatpush1.bf16.msra.mxu0 0
    %254 = vmatprep.subr.bf16.mxu0 0
    %255 = vmatpush1.bf16.msra.mxu0 0
    %256 = vmatprep.subr.bf16.mxu0 0
    %257 = vmatpush1.bf16.msra.mxu0 0
    %258 = vmatprep.subr.bf16.mxu0 0
    %259 = vmatpush1.bf16.msra.mxu0 0
    %260 = vmatprep.subr.bf16.mxu0 0
    %261 = vmatpush1.bf16.msra.mxu0 0
    %262 = vmatprep.subr.bf16.mxu0 0
    %263 = vmatpush1.bf16.msra.mxu0 0
    %264 = vmatprep.subr.bf16.mxu0 0
    %265 = vmatpush1.bf16.msra.mxu0 0
    %266 = vmatprep.subr.bf16.mxu0 0
    %267 = vmatpush1.bf16.msra.mxu0 0
    %268 = vmatprep.subr.bf16.mxu0 0
    %269 = vmatpush1.bf16.msra.mxu0 0
    %270 = vmatprep.subr.bf16.mxu0 0
    %271 = vmatpush1.bf16.msra.mxu0 0
    %272 = vmatprep.subr.bf16.mxu0 0
    %273 = vmatpush1.bf16.msra.mxu0 0
    %274 = vmatprep.subr.bf16.mxu0 0
    %275 = vmatpush1.bf16.msra.mxu0 0
    %276 = vmatprep.subr.bf16.mxu0 0
    %277 = vmatpush1.bf16.msra.mxu0 0
    %278 = vmatprep.mubr.bf16.mxu0 0
    %279 = vmatmul.mubr.bf16.gmra.mrb[0].mxu0 %v235
    %v280 = vpop.f32.mrb[0].mxu0
    %v281 = vadd.f32 %v198, %v280
    %v282 = vpop.f32.mrb[0].mxu0
    %v283 = vpop.f32.mrb[0].mxu0
    %v284 = vadd.f32 %v203, %v283
    %v285 = vpop.f32.mrb[0].mxu0
    %286 = vmatprep.mubr.bf16.mxu0 0
    %287 = vmatmul.mubr.bf16.gmra.mrb[0].mxu0 %v238
    %v288 = vpop.f32.mrb[0].mxu0
    %v289 = vadd.f32 %v208, %v288
    %v290 = vpop.f32.mrb[0].mxu0
    %v291 = vpop.f32.mrb[0].mxu0
    %v292 = vadd.f32 %v213, %v291
    %v293 = vpop.f32.mrb[0].mxu0
    %294 = vmatprep.mubr.bf16.mxu0 0
    %295 = vmatmul.mubr.bf16.gmra.mrb[0].mxu0 %v241
    %v296 = vpop.f32.mrb[0].mxu0
    %v297 = vadd.f32 %v218, %v296
    %v298 = vpop.f32.mrb[0].mxu0
    %v299 = vpop.f32.mrb[0].mxu0
    %v300 = vpop.f32.mrb[0].mxu0
    %301 = vdwg.mxu0
    %v302 = vxor.u32 %v281, 2147483648
    %v303 = vxor.u32 %v284, 2147483648
    %v304 = vxor.u32 %v289, 2147483648
    %v305 = vxor.u32 %v292, 2147483648
    %v306 = vxor.u32 %v297, 2147483648
    %v307 = vmul.f32 %v302, 1.442695
    %v308 = vpow.pop %v307
    %v309 = vmul.f32 %v303, 1.442695
    %v310 = vpow.pop %v309
    %v311 = vmul.f32 %v304, 1.442695
    %v312 = vpow.pop %v311
    %v313 = vmul.f32 %v305, 1.442695
    %v314 = vpow.pop %v313
    %v315 = vmul.f32 %v306, 1.442695
    %v316 = vpow.pop %v315
    %v317 = vadd.f32 %v308, 1.0
    %v318 = vadd.f32 %v310, 1.0
    %v319 = vadd.f32 %v312, 1.0
    %v320 = vadd.f32 %v314, 1.0
    %v321 = vadd.f32 %v316, 1.0
    %v322 = vrcp.pop %v317
    %v323 = vmul.f32 1.0, %v322
    %v324 = vrcp.pop %v318
    %v325 = vmul.f32 1.0, %v324
    %v326 = vrcp.pop %v319
    %v327 = vmul.f32 1.0, %v326
    %v328 = vrcp.pop %v320
    %v329 = vmul.f32 1.0, %v328
    %v330 = vrcp.pop %v321
    %v331 = vmul.f32 1.0, %v330
    %v332 = vmul.f32 %v281, %v323
    %v333 = vmul.f32 %v284, %v325
    %v334 = vmul.f32 %v289, %v327
    %v335 = vmul.f32 %v292, %v329
    %v336 = vmul.f32 %v297, %v331
    %s337 = scalar_lea.vmem %s3, 20
    %v338 = vld [vmem:[%s337] sm:$0xf]
    %v339 = vld [vmem:[%s337 + $0x4] sm:$0xf]
    %v340 = vld [vmem:[%s337 + $0x8] sm:$0xf]
    %v341 = vld [vmem:[%s337 + $0xc] sm:$0xf]
    %v342 = vld [vmem:[%s337 + $0x10] sm:$0x3]
    %v343 = vpack.c.bf16 %v333, %v332
    %v344 = vpack.c.bf16 %v335, %v334
    %v345 = vpack.c.bf16 %v336, %v336
    %s346 = scalar_lea.vmem %s4, 40
    %v347 = vld [vmem:[%s346] sm:$0xff]
    %v348 = vld [vmem:[%s346 + $0x8] sm:$0xff]
    %v349 = vld [vmem:[%s346 + $0x10] sm:$0xff]
    %v350 = vld [vmem:[%s346 + $0x18] sm:$0xff]
    %v351 = vld [vmem:[%s346 + $0x20] sm:$0xf]
    %353 = vset.pattern.permute.xlu0 0
    %354 = vperm.xlu0 %353, %v347
    %v355 = vpop.permute.xlu0 %354
    %358 = vset.pattern.permute.xlu0 0
    %359 = vperm.xlu0 %358, %v348
    %v360 = vpop.permute.xlu0 %359
    %363 = vset.pattern.permute.xlu0 0
    %364 = vperm.xlu0 %363, %v349
    %v365 = vpop.permute.xlu0 %364
    %368 = vset.pattern.permute.xlu0 0
    %369 = vperm.xlu0 %368, %v350
    %v370 = vpop.permute.xlu0 %369
    %373 = vset.pattern.permute.xlu0 0
    %374 = vperm.xlu0 %373, %v351
    %v375 = vpop.permute.xlu0 %374
    %v382 = vunpack.c.l.b16 %v338
    %v383 = vunpack.c.l.b16 %v339
    %v384 = vunpack.c.l.b16 %v340
    %v385 = vunpack.c.l.b16 %v341
    %v386 = vunpack.c.l.b16 %v342
    %v387 = vpack.c.b16 %v383, %v382
    %v388 = vpack.c.b16 %v385, %v384
    %v389 = vpack.c.b16 %v386, %v386
    %v391 = vsel %vm233, %v387, 0
    %v394 = vsel %vm233, %v388, 0
    %v397 = vsel %vm233, %v389, 0
    %v400 = vsel %vm87, %v345, 0
    %402 = vmatprep.subr.bf16.mxu0 0
    %403 = vmatpush1.bf16.msra.mxu0 %v343
    %404 = vmatprep.subr.bf16.mxu0 0
    %405 = vmatpush1.bf16.msra.mxu0 %v344
    %406 = vmatprep.subr.bf16.mxu0 0
    %407 = vmatpush1.bf16.msra.mxu0 %v400
    %408 = vmatprep.subr.bf16.mxu0 0
    %409 = vmatpush1.bf16.msra.mxu0 0
    %410 = vmatprep.subr.bf16.mxu0 0
    %411 = vmatpush1.bf16.msra.mxu0 0
    %412 = vmatprep.subr.bf16.mxu0 0
    %413 = vmatpush1.bf16.msra.mxu0 0
    %414 = vmatprep.subr.bf16.mxu0 0
    %415 = vmatpush1.bf16.msra.mxu0 0
    %416 = vmatprep.subr.bf16.mxu0 0
    %417 = vmatpush1.bf16.msra.mxu0 0
    %418 = vmatprep.subr.bf16.mxu0 0
    %419 = vmatpush1.bf16.msra.mxu0 0
    %420 = vmatprep.subr.bf16.mxu0 0
    %421 = vmatpush1.bf16.msra.mxu0 0
    %422 = vmatprep.subr.bf16.mxu0 0
    %423 = vmatpush1.bf16.msra.mxu0 0
    %424 = vmatprep.subr.bf16.mxu0 0
    %425 = vmatpush1.bf16.msra.mxu0 0
    %426 = vmatprep.subr.bf16.mxu0 0
    %427 = vmatpush1.bf16.msra.mxu0 0
    %428 = vmatprep.subr.bf16.mxu0 0
    %429 = vmatpush1.bf16.msra.mxu0 0
    %430 = vmatprep.subr.bf16.mxu0 0
    %431 = vmatpush1.bf16.msra.mxu0 0
    %432 = vmatprep.subr.bf16.mxu0 0
    %433 = vmatpush1.bf16.msra.mxu0 0
    %434 = vmatprep.mubr.bf16.mxu0 0
    %435 = vmatmul.mubr.bf16.gmra.mrb[0].mxu0 %v391
    %v436 = vpop.f32.mrb[0].mxu0
    %v437 = vadd.f32 %v355, %v436
    %v438 = vpop.f32.mrb[0].mxu0
    %v439 = vpop.f32.mrb[0].mxu0
    %v440 = vadd.f32 %v360, %v439
    %v441 = vpop.f32.mrb[0].mxu0
    %442 = vmatprep.mubr.bf16.mxu0 0
    %443 = vmatmul.mubr.bf16.gmra.mrb[0].mxu0 %v394
    %v444 = vpop.f32.mrb[0].mxu0
    %v445 = vadd.f32 %v365, %v444
    %v446 = vpop.f32.mrb[0].mxu0
    %v447 = vpop.f32.mrb[0].mxu0
    %v448 = vadd.f32 %v370, %v447
    %v449 = vpop.f32.mrb[0].mxu0
    %450 = vmatprep.mubr.bf16.mxu0 0
    %451 = vmatmul.mubr.bf16.gmra.mrb[0].mxu0 %v397
    %v452 = vpop.f32.mrb[0].mxu0
    %v453 = vadd.f32 %v375, %v452
    %v454 = vpop.f32.mrb[0].mxu0
    %v455 = vpop.f32.mrb[0].mxu0
    %v456 = vpop.f32.mrb[0].mxu0
    %457 = vdwg.mxu0
    %v458 = vxor.u32 %v437, 2147483648
    %v459 = vxor.u32 %v440, 2147483648
    %v460 = vxor.u32 %v445, 2147483648
    %v461 = vxor.u32 %v448, 2147483648
    %v462 = vxor.u32 %v453, 2147483648
    %v463 = vmul.f32 %v458, 1.442695
    %v464 = vpow.pop %v463
    %v465 = vmul.f32 %v459, 1.442695
    %v466 = vpow.pop %v465
    %v467 = vmul.f32 %v460, 1.442695
    %v468 = vpow.pop %v467
    %v469 = vmul.f32 %v461, 1.442695
    %v470 = vpow.pop %v469
    %v471 = vmul.f32 %v462, 1.442695
    %v472 = vpow.pop %v471
    %v473 = vadd.f32 %v464, 1.0
    %v474 = vadd.f32 %v466, 1.0
    %v475 = vadd.f32 %v468, 1.0
    %v476 = vadd.f32 %v470, 1.0
    %v477 = vadd.f32 %v472, 1.0
    %v478 = vrcp.pop %v473
    %v479 = vmul.f32 1.0, %v478
    %v480 = vrcp.pop %v474
    %v481 = vmul.f32 1.0, %v480
    %v482 = vrcp.pop %v475
    %v483 = vmul.f32 1.0, %v482
    %v484 = vrcp.pop %v476
    %v485 = vmul.f32 1.0, %v484
    %v486 = vrcp.pop %v477
    %v487 = vmul.f32 1.0, %v486
    %v488 = vmul.f32 %v437, %v479
    %v489 = vmul.f32 %v440, %v481
    %v490 = vmul.f32 %v445, %v483
    %v491 = vmul.f32 %v448, %v485
    %v492 = vmul.f32 %v453, %v487
    %s493 = scalar_lea.vmem %s3, 40
    %v494 = vld [vmem:[%s493] sm:$0xf]
    %v495 = vld [vmem:[%s493 + $0x4] sm:$0xf]
    %v496 = vld [vmem:[%s493 + $0x8] sm:$0xf]
    %v497 = vld [vmem:[%s493 + $0xc] sm:$0xf]
    %v498 = vld [vmem:[%s493 + $0x10] sm:$0x3]
    %v499 = vpack.c.bf16 %v489, %v488
    %v500 = vpack.c.bf16 %v491, %v490
    %v501 = vpack.c.bf16 %v492, %v492
    %s502 = scalar_lea.vmem %s4, 80
    %v503 = vld [vmem:[%s502] sm:$0xff]
    %v504 = vld [vmem:[%s502 + $0x8] sm:$0xff]
    %v505 = vld [vmem:[%s502 + $0x10] sm:$0xff]
    %v506 = vld [vmem:[%s502 + $0x18] sm:$0xff]
    %v507 = vld [vmem:[%s502 + $0x20] sm:$0xf]
    %509 = vset.pattern.permute.xlu0 0
    %510 = vperm.xlu0 %509, %v503
    %v511 = vpop.permute.xlu0 %510
    %514 = vset.pattern.permute.xlu0 0
    %515 = vperm.xlu0 %514, %v504
    %v516 = vpop.permute.xlu0 %515
    %519 = vset.pattern.permute.xlu0 0
    %520 = vperm.xlu0 %519, %v505
    %v521 = vpop.permute.xlu0 %520
    %524 = vset.pattern.permute.xlu0 0
    %525 = vperm.xlu0 %524, %v506
    %v526 = vpop.permute.xlu0 %525
    %529 = vset.pattern.permute.xlu0 0
    %530 = vperm.xlu0 %529, %v507
    %v531 = vpop.permute.xlu0 %530
    %v538 = vunpack.c.l.b16 %v494
    %v539 = vunpack.c.l.b16 %v495
    %v540 = vunpack.c.l.b16 %v496
    %v541 = vunpack.c.l.b16 %v497
    %v542 = vunpack.c.l.b16 %v498
    %v543 = vpack.c.b16 %v539, %v538
    %v544 = vpack.c.b16 %v541, %v540
    %v545 = vpack.c.b16 %v542, %v542
    %v547 = vsel %vm233, %v543, 0
    %v550 = vsel %vm233, %v544, 0
    %v553 = vsel %vm233, %v545, 0
    %v556 = vsel %vm87, %v501, 0
    %558 = vmatprep.subr.bf16.mxu0 0
    %559 = vmatpush1.bf16.msra.mxu0 %v499
    %560 = vmatprep.subr.bf16.mxu0 0
    %561 = vmatpush1.bf16.msra.mxu0 %v500
    %562 = vmatprep.subr.bf16.mxu0 0
    %563 = vmatpush1.bf16.msra.mxu0 %v556
    %564 = vmatprep.subr.bf16.mxu0 0
    %565 = vmatpush1.bf16.msra.mxu0 0
    %566 = vmatprep.subr.bf16.mxu0 0
    %567 = vmatpush1.bf16.msra.mxu0 0
    %568 = vmatprep.subr.bf16.mxu0 0
    %569 = vmatpush1.bf16.msra.mxu0 0
    %570 = vmatprep.subr.bf16.mxu0 0
    %571 = vmatpush1.bf16.msra.mxu0 0
    %572 = vmatprep.subr.bf16.mxu0 0
    %573 = vmatpush1.bf16.msra.mxu0 0
    %574 = vmatprep.subr.bf16.mxu0 0
    %575 = vmatpush1.bf16.msra.mxu0 0
    %576 = vmatprep.subr.bf16.mxu0 0
    %577 = vmatpush1.bf16.msra.mxu0 0
    %578 = vmatprep.subr.bf16.mxu0 0
    %579 = vmatpush1.bf16.msra.mxu0 0
    %580 = vmatprep.subr.bf16.mxu0 0
    %581 = vmatpush1.bf16.msra.mxu0 0
    %582 = vmatprep.subr.bf16.mxu0 0
    %583 = vmatpush1.bf16.msra.mxu0 0
    %584 = vmatprep.subr.bf16.mxu0 0
    %585 = vmatpush1.bf16.msra.mxu0 0
    %586 = vmatprep.subr.bf16.mxu0 0
    %587 = vmatpush1.bf16.msra.mxu0 0
    %588 = vmatprep.subr.bf16.mxu0 0
    %589 = vmatpush1.bf16.msra.mxu0 0
    %590 = vmatprep.mubr.bf16.mxu0 0
    %591 = vmatmul.mubr.bf16.gmra.mrb[0].mxu0 %v547
    %v592 = vpop.f32.mrb[0].mxu0
    %v593 = vadd.f32 %v511, %v592
    %v594 = vpop.f32.mrb[0].mxu0
    %v595 = vpop.f32.mrb[0].mxu0
    %v596 = vadd.f32 %v516, %v595
    %v597 = vpop.f32.mrb[0].mxu0
    %598 = vmatprep.mubr.bf16.mxu0 0
    %599 = vmatmul.mubr.bf16.gmra.mrb[0].mxu0 %v550
    %v600 = vpop.f32.mrb[0].mxu0
    %v601 = vadd.f32 %v521, %v600
    %v602 = vpop.f32.mrb[0].mxu0
    %v603 = vpop.f32.mrb[0].mxu0
    %v604 = vadd.f32 %v526, %v603
    %v605 = vpop.f32.mrb[0].mxu0
    %606 = vmatprep.mubr.bf16.mxu0 0
    %607 = vmatmul.mubr.bf16.gmra.mrb[0].mxu0 %v553
    %v608 = vpop.f32.mrb[0].mxu0
    %v609 = vadd.f32 %v531, %v608
    %v610 = vpop.f32.mrb[0].mxu0
    %v611 = vpop.f32.mrb[0].mxu0
    %v612 = vpop.f32.mrb[0].mxu0
    %613 = vdwg.mxu0
    %v614 = vxor.u32 %v593, 2147483648
    %v615 = vxor.u32 %v596, 2147483648
    %v616 = vxor.u32 %v601, 2147483648
    %v617 = vxor.u32 %v604, 2147483648
    %v618 = vxor.u32 %v609, 2147483648
    %v619 = vmul.f32 %v614, 1.442695
    %v620 = vpow.pop %v619
    %v621 = vmul.f32 %v615, 1.442695
    %v622 = vpow.pop %v621
    %v623 = vmul.f32 %v616, 1.442695
    %v624 = vpow.pop %v623
    %v625 = vmul.f32 %v617, 1.442695
    %v626 = vpow.pop %v625
    %v627 = vmul.f32 %v618, 1.442695
    %v628 = vpow.pop %v627
    %v629 = vadd.f32 %v620, 1.0
    %v630 = vadd.f32 %v622, 1.0
    %v631 = vadd.f32 %v624, 1.0
    %v632 = vadd.f32 %v626, 1.0
    %v633 = vadd.f32 %v628, 1.0
    %v634 = vrcp.pop %v629
    %v635 = vmul.f32 1.0, %v634
    %v636 = vrcp.pop %v630
    %v637 = vmul.f32 1.0, %v636
    %v638 = vrcp.pop %v631
    %v639 = vmul.f32 1.0, %v638
    %v640 = vrcp.pop %v632
    %v641 = vmul.f32 1.0, %v640
    %v642 = vrcp.pop %v633
    %v643 = vmul.f32 1.0, %v642
    %v644 = vmul.f32 %v593, %v635
    %v645 = vmul.f32 %v596, %v637
    %v646 = vmul.f32 %v601, %v639
    %v647 = vmul.f32 %v604, %v641
    %v648 = vmul.f32 %v609, %v643
    %s649 = scalar_lea.vmem %s3, 60
    %v650 = vld [vmem:[%s649] sm:$0xf]
    %v651 = vld [vmem:[%s649 + $0x4] sm:$0xf]
    %v652 = vld [vmem:[%s649 + $0x8] sm:$0xf]
    %v653 = vld [vmem:[%s649 + $0xc] sm:$0xf]
    %v654 = vld [vmem:[%s649 + $0x10] sm:$0x3]
    %v655 = vpack.c.bf16 %v645, %v644
    %v656 = vpack.c.bf16 %v647, %v646
    %v657 = vpack.c.bf16 %v648, %v648
    %s658 = scalar_lea.vmem %s4, 120
    %v659 = vld [vmem:[%s658] sm:$0xff]
    %v660 = vld [vmem:[%s658 + $0x8] sm:$0xff]
    %v661 = vld [vmem:[%s658 + $0x10] sm:$0xff]
    %v662 = vld [vmem:[%s658 + $0x18] sm:$0xff]
    %v663 = vld [vmem:[%s658 + $0x20] sm:$0xf]
    %665 = vset.pattern.permute.xlu0 0
    %666 = vperm.xlu0 %665, %v659
    %v667 = vpop.permute.xlu0 %666
    %670 = vset.pattern.permute.xlu0 0
    %671 = vperm.xlu0 %670, %v660
    %v672 = vpop.permute.xlu0 %671
    %675 = vset.pattern.permute.xlu0 0
    %676 = vperm.xlu0 %675, %v661
    %v677 = vpop.permute.xlu0 %676
    %680 = vset.pattern.permute.xlu0 0
    %681 = vperm.xlu0 %680, %v662
    %v682 = vpop.permute.xlu0 %681
    %685 = vset.pattern.permute.xlu0 0
    %686 = vperm.xlu0 %685, %v663
    %v687 = vpop.permute.xlu0 %686
    %v694 = vunpack.c.l.b16 %v650
    %v695 = vunpack.c.l.b16 %v651
    %v696 = vunpack.c.l.b16 %v652
    %v697 = vunpack.c.l.b16 %v653
    %v698 = vunpack.c.l.b16 %v654
    %v699 = vpack.c.b16 %v695, %v694
    %v700 = vpack.c.b16 %v697, %v696
    %v701 = vpack.c.b16 %v698, %v698
    %v703 = vsel %vm233, %v699, 0
    %v706 = vsel %vm233, %v700, 0
    %v709 = vsel %vm233, %v701, 0
    %v712 = vsel %vm87, %v657, 0
    %714 = vmatprep.subr.bf16.mxu0 0
    %715 = vmatpush1.bf16.msra.mxu0 %v655
    %716 = vmatprep.subr.bf16.mxu0 0
    %717 = vmatpush1.bf16.msra.mxu0 %v656
    %718 = vmatprep.subr.bf16.mxu0 0
    %719 = vmatpush1.bf16.msra.mxu0 %v712
    %720 = vmatprep.subr.bf16.mxu0 0
    %721 = vmatpush1.bf16.msra.mxu0 0
    %722 = vmatprep.subr.bf16.mxu0 0
    %723 = vmatpush1.bf16.msra.mxu0 0
    %724 = vmatprep.subr.bf16.mxu0 0
    %725 = vmatpush1.bf16.msra.mxu0 0
    %726 = vmatprep.subr.bf16.mxu0 0
    %727 = vmatpush1.bf16.msra.mxu0 0
    %728 = vmatprep.subr.bf16.mxu0 0
    %729 = vmatpush1.bf16.msra.mxu0 0
    %730 = vmatprep.subr.bf16.mxu0 0
    %731 = vmatpush1.bf16.msra.mxu0 0
    %732 = vmatprep.subr.bf16.mxu0 0
    %733 = vmatpush1.bf16.msra.mxu0 0
    %734 = vmatprep.subr.bf16.mxu0 0
    %735 = vmatpush1.bf16.msra.mxu0 0
    %736 = vmatprep.subr.bf16.mxu0 0
    %737 = vmatpush1.bf16.msra.mxu0 0
    %738 = vmatprep.subr.bf16.mxu0 0
    %739 = vmatpush1.bf16.msra.mxu0 0
    %740 = vmatprep.subr.bf16.mxu0 0
    %741 = vmatpush1.bf16.msra.mxu0 0
    %742 = vmatprep.subr.bf16.mxu0 0
    %743 = vmatpush1.bf16.msra.mxu0 0
    %744 = vmatprep.subr.bf16.mxu0 0
    %745 = vmatpush1.bf16.msra.mxu0 0
    %746 = vmatprep.mubr.bf16.mxu0 0
    %747 = vmatmul.mubr.bf16.gmra.mrb[0].mxu0 %v703
    %v748 = vpop.f32.mrb[0].mxu0
    %v749 = vadd.f32 %v667, %v748
    %v750 = vpop.f32.mrb[0].mxu0
    %v751 = vpop.f32.mrb[0].mxu0
    %v752 = vadd.f32 %v672, %v751
    %v753 = vpop.f32.mrb[0].mxu0
    %754 = vmatprep.mubr.bf16.mxu0 0
    %755 = vmatmul.mubr.bf16.gmra.mrb[0].mxu0 %v706
    %v756 = vpop.f32.mrb[0].mxu0
    %v757 = vadd.f32 %v677, %v756
    %v758 = vpop.f32.mrb[0].mxu0
    %v759 = vpop.f32.mrb[0].mxu0
    %v760 = vadd.f32 %v682, %v759
    %v761 = vpop.f32.mrb[0].mxu0
    %762 = vmatprep.mubr.bf16.mxu0 0
    %763 = vmatmul.mubr.bf16.gmra.mrb[0].mxu0 %v709
    %v764 = vpop.f32.mrb[0].mxu0
    %v765 = vadd.f32 %v687, %v764
    %v766 = vpop.f32.mrb[0].mxu0
    %v767 = vpop.f32.mrb[0].mxu0
    %v768 = vpop.f32.mrb[0].mxu0
    %769 = vdwg.mxu0
    %v770 = vxor.u32 %v749, 2147483648
    %v771 = vxor.u32 %v752, 2147483648
    %v772 = vxor.u32 %v757, 2147483648
    %v773 = vxor.u32 %v760, 2147483648
    %v774 = vxor.u32 %v765, 2147483648
    %v775 = vmul.f32 %v770, 1.442695
    %v776 = vpow.pop %v775
    %v777 = vmul.f32 %v771, 1.442695
    %v778 = vpow.pop %v777
    %v779 = vmul.f32 %v772, 1.442695
    %v780 = vpow.pop %v779
    %v781 = vmul.f32 %v773, 1.442695
    %v782 = vpow.pop %v781
    %v783 = vmul.f32 %v774, 1.442695
    %v784 = vpow.pop %v783
    %v785 = vadd.f32 %v776, 1.0
    %v786 = vadd.f32 %v778, 1.0
    %v787 = vadd.f32 %v780, 1.0
    %v788 = vadd.f32 %v782, 1.0
    %v789 = vadd.f32 %v784, 1.0
    %v790 = vrcp.pop %v785
    %v791 = vmul.f32 1.0, %v790
    %v792 = vrcp.pop %v786
    %v793 = vmul.f32 1.0, %v792
    %v794 = vrcp.pop %v787
    %v795 = vmul.f32 1.0, %v794
    %v796 = vrcp.pop %v788
    %v797 = vmul.f32 1.0, %v796
    %v798 = vrcp.pop %v789
    %v799 = vmul.f32 1.0, %v798
    %v800 = vmul.f32 %v749, %v791
    %v801 = vmul.f32 %v752, %v793
    %v802 = vmul.f32 %v757, %v795
    %v803 = vmul.f32 %v760, %v797
    %v804 = vmul.f32 %v765, %v799
    %v805 = vld [vmem:[%s5] sm:$0x3]
    %v806 = vpack.c.bf16 %v801, %v800
    %v807 = vpack.c.bf16 %v803, %v802
    %v808 = vpack.c.bf16 %v804, %v804
    %v809 = vld [vmem:[%s6] sm:$0x7]
    %811 = vset.pattern.permute.xlu0 0
    %812 = vperm.xlu0 %811, %v809
    %v813 = vpop.permute.xlu0 %812
    %v816 = vsel %vm233, %v805, 0
    %v819 = vsel %vm87, %v808, 0
    %821 = vmatprep.subr.bf16.mxu0 0
    %822 = vmatpush1.bf16.msra.mxu0 %v806
    %823 = vmatprep.subr.bf16.mxu0 0
    %824 = vmatpush1.bf16.msra.mxu0 %v807
    %825 = vmatprep.subr.bf16.mxu0 0
    %826 = vmatpush1.bf16.msra.mxu0 %v819
    %827 = vmatprep.subr.bf16.mxu0 0
    %828 = vmatpush1.bf16.msra.mxu0 0
    %829 = vmatprep.subr.bf16.mxu0 0
    %830 = vmatpush1.bf16.msra.mxu0 0
    %831 = vmatprep.subr.bf16.mxu0 0
    %832 = vmatpush1.bf16.msra.mxu0 0
    %833 = vmatprep.subr.bf16.mxu0 0
    %834 = vmatpush1.bf16.msra.mxu0 0
    %835 = vmatprep.subr.bf16.mxu0 0
    %836 = vmatpush1.bf16.msra.mxu0 0
    %837 = vmatprep.subr.bf16.mxu0 0
    %838 = vmatpush1.bf16.msra.mxu0 0
    %839 = vmatprep.subr.bf16.mxu0 0
    %840 = vmatpush1.bf16.msra.mxu0 0
    %841 = vmatprep.subr.bf16.mxu0 0
    %842 = vmatpush1.bf16.msra.mxu0 0
    %843 = vmatprep.subr.bf16.mxu0 0
    %844 = vmatpush1.bf16.msra.mxu0 0
    %845 = vmatprep.subr.bf16.mxu0 0
    %846 = vmatpush1.bf16.msra.mxu0 0
    %847 = vmatprep.subr.bf16.mxu0 0
    %848 = vmatpush1.bf16.msra.mxu0 0
    %849 = vmatprep.subr.bf16.mxu0 0
    %850 = vmatpush1.bf16.msra.mxu0 0
    %851 = vmatprep.subr.bf16.mxu0 0
    %852 = vmatpush1.bf16.msra.mxu0 0
    %853 = vmatprep.mubr.bf16.mxu0 0
    %854 = vmatmul.mubr.bf16.gmra.mrb[0].mxu0 %v816
    %v855 = vpop.f32.mrb[0].mxu0
    %v856 = vadd.f32 %v813, %v855
    %v857 = vpop.f32.mrb[0].mxu0
    %v858 = vpop.f32.mrb[0].mxu0
    %v859 = vpop.f32.mrb[0].mxu0
    %860 = vdwg.mxu0
    %861 = vst [vmem:[#allocation2] sm:$0x7] %v856
    // Predicated region
    $region30: #{tpu_custom_call.1} parent=1 // pred_check
      _
    $region31: #{tpu_custom_call.1} parent=1 // pred_check_branch
      %863 = sbr.rel (0) target = $region33
    $region32: #{tpu_custom_call.1} parent=1 // pred_region
      %s865 = ssub.s32 64, 64
      %866 = vsyncadd [#allocation3], %s865
      %s868 = sshll.u32 [#allocation2], 4
      %s869 = int_to_ptr.vmem [resolvable:$true] %s868
      %871 = dma.vmem_to_hbm [thread:$0]  %s869, 64, %s7, [#allocation3]
    $region33: #{tpu_custom_call.1} parent=1 // pred_fallthru
      _
    // Predicated region
    $region34: #{tpu_custom_call.1} parent=1 // pred_check
      _
    $region35: #{tpu_custom_call.1} parent=1 // pred_check_branch
      %873 = sbr.rel (0) target = $region37
    $region36: #{tpu_custom_call.1} parent=1 // pred_region
      %874 = dma.done [#allocation3], 64
    $region37: #{tpu_custom_call.1} parent=1 // pred_fallthru
      _
    %875 = vsyncpa [#allocation3], 1

</llo_original>
